<compile_context>
chip_gen: v5e
topology: v5e:2x2
jax: 0.10.0
libtpu: 0.0.40
codegen_flags: <defaults>
</compile_context>

<pallas_src>
import functools

import jax
import jax.numpy as jnp
from jax.experimental import pallas as pl
from jax.experimental.pallas import tpu as pltpu

CLAMP_MIN = -1.0
CLAMP_MAX = 1.0
EPS = 1e-5  # F.instance_norm default


def _norm_clamp_mul_max(y, m_b, n_true):
    # y:   (C_out, Np) conv output; padded lanes are exactly zero.
    # m_b: (C_out, Np) pre-broadcast multiplier.
    # Sum-based single-sweep stats: zero-padded lanes contribute nothing.
    s1 = jnp.sum(y, axis=-1, keepdims=True)
    s2 = jnp.sum(y * y, axis=-1, keepdims=True)
    inv_n = 1.0 / n_true
    mean = s1 * inv_n
    var = jnp.maximum(s2 * inv_n - mean * mean, 0.0)
    y = (y - mean) * jax.lax.rsqrt(var + EPS)
    y = jnp.clip(y, CLAMP_MIN, CLAMP_MAX)
    y = y * m_b
    return jnp.max(y, axis=0, keepdims=True)  # (1, Np) channel max


def _fused_kernel_grid(p_ref, w_ref, m_ref, o_ref, *, n_true):
    # p_ref: (Kp, Np)    zero-padded im2col patches for one batch (N on lanes)
    # w_ref: (C_out, Kp) conv weight, pre-scaled by the multiplier (bias
    #                    dropped: a per-channel constant cancels under IN)
    # m_ref: (C_out, 1)  multiplier (applied again after norm + clamp)
    # o_ref: (1, Np)     per-batch channel-max, lane-dense
    y = jnp.dot(w_ref[...], p_ref[...], preferred_element_type=jnp.float32)
    m_b = jnp.broadcast_to(m_ref[...], y.shape)
    o_ref[...] = _norm_clamp_mul_max(y, m_b, n_true)


def _fused_kernel_all(p_ref, w_ref, m_ref, o_ref, *, n_true, n_pad, batch):
    # Single-invocation variant (single-TensorCore chips): all batches in one
    # grid step; tiny static unroll over B.
    w = w_ref[...]                                            # (C_out, Kp)
    m_b = jnp.broadcast_to(m_ref[...], (w.shape[0], n_pad))   # hoisted
    for b in range(batch):                                    # static, B small
        y = jnp.dot(w, p_ref[b], preferred_element_type=jnp.float32)
        o_ref[b] = _norm_clamp_mul_max(y, m_b, n_true)


def _im2col_padded(x, k, k_pad, n_pad):
    # x: (B, C, D, H, W) -> (B, Kp, Np) zero-padded patches with
    #   K ordered (ci, dz, dy, dx)  (matches conv_weight.reshape(C_out, K))
    #   N ordered (z, y, x)         (matches output reshape to (Dp, Hp, Wp))
    B, C, D, H, W = x.shape
    Dp, Hp, Wp = D - k + 1, H - k + 1, W - k + 1
    slabs = []
    for dz in range(k):
        for dy in range(k):
            for dx in range(k):
                slabs.append(x[:, :, dz:dz + Dp, dy:dy + Hp, dx:dx + Wp])
    p = jnp.stack(slabs, axis=2)                    # (B, C, k^3, Dp, Hp, Wp)
    K, N = C * k ** 3, Dp * Hp * Wp
    p = p.reshape(B, K, N)                          # (B, K, N)
    p = jnp.pad(p, ((0, 0), (0, k_pad - K), (0, n_pad - N)))
    return p, (Dp, Hp, Wp)


def _round_up(v, mult):
    return ((v + mult - 1) // mult) * mult


def _single_tensorcore_chip() -> bool:
    # v5e / v6e: one TensorCore per chip -> collapse the batch grid.
    # v7x: two TCs -> keep grid=(B,) "parallel" so batches shard across cores.
    try:
        kind = jax.devices()[0].device_kind.lower()
    except Exception:
        return False
    return any(s in kind for s in
               ("v5e", "v5 lite", "v5lite", "v6e", "v6 lite", "trillium"))


@jax.jit
def fused_forward(x, conv_weight, conv_bias, multiplier):
    del conv_bias  # exactly cancelled by instance-norm mean subtraction
    B = x.shape[0]
    C_out, C_in, kD, kH, kW = conv_weight.shape
    assert kD == kH == kW
    k = kD

    K = C_in * k ** 3
    Kp = _round_up(K, 8)      # sublane-align the contraction dim (f32)
    patches, (Dp, Hp, Wp) = _im2col_padded(x.astype(jnp.float32), k,
                                           Kp, _round_up(Dp_Hp_Wp(x, k), 128)) \
        if False else _im2col_padded(x.astype(jnp.float32), k, Kp,
                                     _round_up((x.shape[2] - k + 1)
                                               * (x.shape[3] - k + 1)
                                               * (x.shape[4] - k + 1), 128))
    N = Dp * Hp * Wp
    Np = patches.shape[-1]    # lane-aligned (multiple of 128)

    m_col = multiplier.reshape(C_out, 1).astype(jnp.float32)
    # Fold the pre-norm multiplier into the weight (exact: (Wx) * m = (W*m) x).
    w_mat = (conv_weight.reshape(C_out, K).astype(jnp.float32) * m_col)
    w_mat = jnp.pad(w_mat, ((0, 0), (0, Kp - K)))

    cost = pl.CostEstimate(
        flops=int(B * (2 * C_out * Kp * Np + 8 * C_out * Np)),
        transcendentals=int(B * C_out),
        bytes_accessed=int(4 * (patches.size + w_mat.size + m_col.size
                                + B * Np)),
    )

    if _single_tensorcore_chip():
        # One grid step for the whole batch (no per-step pipeline overhead).
        out = pl.pallas_call(
            functools.partial(_fused_kernel_all, n_true=N, n_pad=Np, batch=B),
            out_shape=jax.ShapeDtypeStruct((B, 1, Np), jnp.float32),
            grid_spec=pltpu.PrefetchScalarGridSpec(
                num_scalar_prefetch=0,
                grid=(1,),
                in_specs=[
                    pl.BlockSpec((B, Kp, Np), lambda i: (0, 0, 0)),
                    pl.BlockSpec((C_out, Kp), lambda i: (0, 0)),
                    pl.BlockSpec((C_out, 1), lambda i: (0, 0)),
                ],
                out_specs=pl.BlockSpec((B, 1, Np), lambda i: (0, 0, 0)),
            ),
            compiler_params=pltpu.CompilerParams(
                dimension_semantics=("arbitrary",)),
            cost_estimate=cost,
        )(patches, w_mat, m_col)
    else:
        # One batch element per grid step; "parallel" shards across TCs (v7x).
        out = pl.pallas_call(
            functools.partial(_fused_kernel_grid, n_true=N),
            out_shape=jax.ShapeDtypeStruct((B, 1, Np), jnp.float32),
            grid_spec=pltpu.PrefetchScalarGridSpec(
                num_scalar_prefetch=0,
                grid=(B,),
                in_specs=[
                    pl.BlockSpec((pl.Squeezed(), Kp, Np), lambda b: (b, 0, 0)),
                    pl.BlockSpec((C_out, Kp), lambda b: (0, 0)),
                    pl.BlockSpec((C_out, 1), lambda b: (0, 0)),
                ],
                out_specs=pl.BlockSpec((pl.Squeezed(), 1, Np),
                                       lambda b: (b, 0, 0)),
            ),
            compiler_params=pltpu.CompilerParams(
                dimension_semantics=("parallel",)),
            cost_estimate=cost,
        )(patches, w_mat, m_col)

    # Drop the zero-padded lanes and restore spatial shape.
    return out[:, :, :N].reshape(B, 1, Dp, Hp, Wp)


def Dp_Hp_Wp(x, k):  # (unused helper kept trivial; see inline expression)
    return (x.shape[2] - k + 1) * (x.shape[3] - k + 1) * (x.shape[4] - k + 1)


def _reference(x, conv_weight, conv_bias, multiplier):
    # pure-JAX reference for sanity checking (mirrors the PyTorch module)
    y = jax.lax.conv_general_dilated(
        x, conv_weight, window_strides=(1, 1, 1), padding="VALID",
        dimension_numbers=("NCDHW", "OIDHW", "NCDHW"))
    y = y + conv_bias.reshape(1, -1, 1, 1, 1)
    m = multiplier.reshape(1, -1, 1, 1, 1)
    y = y * m
    mean = jnp.mean(y, axis=(2, 3, 4), keepdims=True)
    var = jnp.mean((y - mean) ** 2, axis=(2, 3, 4), keepdims=True)
    y = (y - mean) * jax.lax.rsqrt(var + EPS)
    y = jnp.clip(y, CLAMP_MIN, CLAMP_MAX)
    y = y * m
    return jnp.max(y, axis=1, keepdims=True)


if __name__ == "__main__":
    in_channels = 3
    out_channels = 16
    kernel_size = 3
    B, D, H, W = 2, 8, 8, 8

    key = jax.random.PRNGKey(0)
    kx, kw, kb, km = jax.random.split(key, 4)

    x = jax.random.normal(kx, (B, in_channels, D, H, W), dtype=jnp.float32)

    fan_in = in_channels * kernel_size ** 3
    bound = 1.0 / (fan_in ** 0.5)
    conv_weight = jax.random.uniform(
        kw, (out_channels, in_channels, kernel_size, kernel_size, kernel_size),
        minval=-bound, maxval=bound, dtype=jnp.float32)
    conv_bias = jax.random.uniform(
        kb, (out_channels,), minval=-bound, maxval=bound, dtype=jnp.float32)
    multiplier = jax.random.normal(km, (out_channels, 1, 1, 1),
                                   dtype=jnp.float32)

    out = fused_forward(x, conv_weight, conv_bias, multiplier)
    out = jax.block_until_ready(out)

    ref = jax.block_until_ready(
        _reference(x, conv_weight, conv_bias, multiplier))
    assert out.shape == (B, 1, D - 2, H - 2, W - 2), out.shape
    assert jnp.allclose(out, ref, atol=1e-4, rtol=1e-4), float(
        jnp.max(jnp.abs(out - ref)))

    print("KERNEL_OK")
</pallas_src>

<mosaic_0001>
module attributes {stable_mosaic.version = 11 : i64} {
  func.func @_fused_kernel_grid(%arg0: i32, %arg1: memref<1x88x256xf32, #tpu.memory_space<vmem>>, %arg2: memref<16x88xf32, #tpu.memory_space<vmem>>, %arg3: memref<16x1xf32, #tpu.memory_space<vmem>>, %arg4: memref<1x1x256xf32, #tpu.memory_space<vmem>>) attributes {dimension_semantics = [#tpu.dimension_semantics<parallel>], iteration_bounds = array<i64: 2>, scalar_prefetch = 0 : i64, scratch_operands = 0 : i64, tpu.core_type = #tpu.core_type<tc>, window_params = [{transform_indices = @transform_0, window_bounds = array<i64: 1, 88, 256>}, {pipeline_mode = #tpu.pipeline_mode<synchronous>, transform_indices = @transform_1, window_bounds = array<i64: 16, 88>}, {pipeline_mode = #tpu.pipeline_mode<synchronous>, transform_indices = @transform_2, window_bounds = array<i64: 16, 1>}, {transform_indices = @transform_3, window_bounds = array<i64: 1, 1, 256>}]} {
    %c0 = arith.constant 0 : index
    %c0_0 = arith.constant 0 : index
    %0 = vector.load %arg2[%c0, %c0_0] : memref<16x88xf32, #tpu.memory_space<vmem>>, vector<16x88xf32>
    %c0_1 = arith.constant 0 : index
    %c0_2 = arith.constant 0 : index
    %c0_3 = arith.constant 0 : index
    %1 = vector.load %arg1[%c0_1, %c0_2, %c0_3] : memref<1x88x256xf32, #tpu.memory_space<vmem>>, vector<1x88x256xf32>
    %2 = vector.shape_cast %1 : vector<1x88x256xf32> to vector<88x256xf32>
    %cst = arith.constant dense<0.000000e+00> : vector<16x256xf32>
    %3 = tpu.matmul %0, %2, %cst {dimension_numbers = #tpu.dot_dimension_numbers<[1], [0], [0], [1], [0, 0, 1, 1], [], []>} : vector<16x88xf32>, vector<88x256xf32>, vector<16x256xf32> -> vector<16x256xf32>
    %c0_4 = arith.constant 0 : index
    %c0_5 = arith.constant 0 : index
    %4 = vector.load %arg3[%c0_4, %c0_5] : memref<16x1xf32, #tpu.memory_space<vmem>>, vector<16x1xf32>
    %5 = vector.shape_cast %4 : vector<16x1xf32> to vector<16x1xf32>
    %6 = vector.broadcast %5 : vector<16x1xf32> to vector<16x256xf32>
    %cst_6 = arith.constant dense<0.000000e+00> : vector<16xf32>
    %7 = vector.multi_reduction <add>, %3, %cst_6 [1] : vector<16x256xf32> to vector<16xf32>
    %8 = vector.shape_cast %7 : vector<16xf32> to vector<16x1xf32>
    %9 = arith.mulf %3, %3 : vector<16x256xf32>
    %cst_7 = arith.constant dense<0.000000e+00> : vector<16xf32>
    %10 = vector.multi_reduction <add>, %9, %cst_7 [1] : vector<16x256xf32> to vector<16xf32>
    %11 = vector.shape_cast %10 : vector<16xf32> to vector<16x1xf32>
    %cst_8 = arith.constant 0.00462962966 : f32
    %12 = vector.broadcast %cst_8 : f32 to vector<16x1xf32>
    %13 = arith.mulf %8, %12 : vector<16x1xf32>
    %cst_9 = arith.constant 0.00462962966 : f32
    %14 = vector.broadcast %cst_9 : f32 to vector<16x1xf32>
    %15 = arith.mulf %11, %14 : vector<16x1xf32>
    %16 = arith.mulf %13, %13 : vector<16x1xf32>
    %17 = arith.subf %15, %16 : vector<16x1xf32>
    %cst_10 = arith.constant 0.000000e+00 : f32
    %18 = vector.broadcast %cst_10 : f32 to vector<16x1xf32>
    %19 = arith.maximumf %17, %18 : vector<16x1xf32>
    %20 = vector.broadcast %13 : vector<16x1xf32> to vector<16x256xf32>
    %21 = arith.subf %3, %20 : vector<16x256xf32>
    %cst_11 = arith.constant 9.99999974E-6 : f32
    %22 = vector.broadcast %cst_11 : f32 to vector<16x1xf32>
    %23 = arith.addf %19, %22 : vector<16x1xf32>
    %24 = math.rsqrt %23 : vector<16x1xf32>
    %25 = vector.broadcast %24 : vector<16x1xf32> to vector<16x256xf32>
    %26 = arith.mulf %21, %25 : vector<16x256xf32>
    %cst_12 = arith.constant -1.000000e+00 : f32
    %cst_13 = arith.constant 1.000000e+00 : f32
    %27 = vector.broadcast %cst_12 : f32 to vector<16x256xf32>
    %28 = arith.maximumf %27, %26 : vector<16x256xf32>
    %29 = vector.broadcast %cst_13 : f32 to vector<16x256xf32>
    %30 = arith.minimumf %29, %28 : vector<16x256xf32>
    %31 = arith.mulf %30, %6 : vector<16x256xf32>
    %cst_14 = arith.constant dense<0xFF800000> : vector<256xf32>
    %32 = vector.multi_reduction <maximumf>, %31, %cst_14 [0] : vector<16x256xf32> to vector<256xf32>
    %33 = vector.shape_cast %32 : vector<256xf32> to vector<1x256xf32>
    %c0_15 = arith.constant 0 : index
    %c0_16 = arith.constant 0 : index
    %c0_17 = arith.constant 0 : index
    %34 = vector.load %arg4[%c0_15, %c0_16, %c0_17] : memref<1x1x256xf32, #tpu.memory_space<vmem>>, vector<1x1x256xf32>
    %35 = vector.shape_cast %34 : vector<1x1x256xf32> to vector<1x256xf32>
    %36 = vector.shape_cast %33 : vector<1x256xf32> to vector<1x1x256xf32>
    tpu.vector_store %arg4[%c0_15, %c0_16, %c0_17], %36 {strides = array<i32>} : memref<1x1x256xf32, #tpu.memory_space<vmem>>, vector<1x1x256xf32>,
    return
  }
  func.func @transform_0(%arg0: i32) -> (i32, i32, i32) {
    %c0_i32 = arith.constant 0 : i32
    %c0_i32_0 = arith.constant 0 : i32
    %c0_i32_1 = arith.constant 0 : i32
    return %arg0, %c0_i32, %c0_i32_0 : i32, i32, i32
  }
  func.func @transform_1(%arg0: i32) -> (i32, i32) {
    %c0_i32 = arith.constant 0 : i32
    %c0_i32_0 = arith.constant 0 : i32
    %c0_i32_1 = arith.constant 0 : i32
    return %c0_i32, %c0_i32_0 : i32, i32
  }
  func.func @transform_2(%arg0: i32) -> (i32, i32) {
    %c0_i32 = arith.constant 0 : i32
    %c0_i32_0 = arith.constant 0 : i32
    %c0_i32_1 = arith.constant 0 : i32
    return %c0_i32, %c0_i32_0 : i32, i32
  }
  func.func @transform_3(%arg0: i32) -> (i32, i32, i32) {
    %c0_i32 = arith.constant 0 : i32
    %c0_i32_0 = arith.constant 0 : i32
    %c0_i32_1 = arith.constant 0 : i32
    return %arg0, %c0_i32, %c0_i32_0 : i32, i32, i32
  }
}

</mosaic_0001>

<llo_original>
// kernel: fused_forward.1
$region0: #{fused_forward.1}
  #allocation0 [shape = 'u32[]', space=smem, size = 0x4, offset = 0x4, fixed_abs, tag = 'smem constant byte address 0x4 - core index']
  #allocation1 [shape = 'u32[72,128]{1,0:T(1,128)}', space=vmem, size = 0x9000, scoped, tag = 'internal scratch']
  %s0 = inlined_call_operand.vmem [shape: f32[2,88,256], index: 0, kind: input, shape index: {}]
  %s1 = inlined_call_operand.vmem [shape: f32[16,88], index: 1, kind: input, shape index: {}]
  %s2 = inlined_call_operand.vmem [shape: f32[16,1], index: 2, kind: input, shape index: {}]
  %s3 = inlined_call_operand.vmem [shape: f32[2,1,256], index: 3, kind: output, shape index: {}]
  %s4 = sld [smem:[#allocation0]]
  $region45: #{fused_forward.1} parent=0
    _
  %s6 = ssub.s32 1, %s4
  %s7 = scalar_select 0, %s6, %s4
  loop: start=0, step=1, limit=4
  $region2: #{fused_forward.1} parent=0 // loop_pre_header
    _
  $region3: #{fused_forward.1} parent=0 // loop_header
    %s9 = sphi 0, %s13
    %p10 = scmp.ge.s32.totalorder %s9, 4
    %s19 = sphi 0, %s21
    %s22 = sphi 0, %s19
    %s23 = sphi 0, %s22
    %s39 = sphi 0, %s23
    %s43 = sphi 0, %s43
    %s45 = sphi 0, %s43
    %s46 = sphi 0, %s45
    %s60 = sphi 0, %s46
    %s64 = sphi 0, %s64
    %s66 = sphi 0, %s64
    %s67 = sphi 0, %s66
    %s81 = sphi 0, %s67
    %s87 = sphi 0, %s89
    %s90 = sphi 0, %s87
    %s91 = sphi 0, %s90
    %s107 = sphi 0, %s91
  $region4: #{fused_forward.1} parent=0 // loop_header_branch
    %12 = sbr.rel (%p10) target = $region8
  $region5: #{fused_forward.1} parent=0 // loop_body
    %s14 = ssub.s32 %s9, 1
    %s15 = ssub.s32 %s9, 2
    %s16 = sadd.s32 %s9, 1
    %s17 = ssub.s32 %s9, %s16
    %p18 = scmp.eq.s32.totalorder %s17, 0
    %s20 = sadd.s32 %s19, 1
    %s21 = scalar_select %p18, %s19, %s20
    %p24 = pneg %p18
    %p25 = scmp.eq.s32.totalorder %s9, 1
    %p26 = por %p24, %p25
    %p27 = scmp.ne.s32.totalorder %s19, %s22
    %p28 = scmp.eq.s32.totalorder %s9, 0
    %p29 = por %p27, %p28
    %p30 = scmp.ne.s32.totalorder %s19, %s22
    %p31 = scmp.eq.s32.totalorder %s14, 1
    %p32 = por %p30, %p31
    %p33 = scmp.ne.s32.totalorder %s22, %s23
    %p34 = scmp.eq.s32.totalorder %s14, 0
    %p35 = por %p33, %p34
    %p36 = scmp.ne.s32.totalorder %s22, %s23
    %p37 = scmp.eq.s32.totalorder %s15, 1
    %p38 = por %p36, %p37
    %p40 = scmp.ne.s32.totalorder %s23, %s39
    %p41 = scmp.eq.s32.totalorder %s15, 0
    %p42 = por %p40, %p41
    %s44 = sadd.s32 %s43, 1
    %p47 = scmp.eq.s32.totalorder %s9, 1
    %p48 = scmp.ne.s32.totalorder %s43, %s45
    %p49 = scmp.eq.s32.totalorder %s9, 0
    %p50 = por %p48, %p49
    %p51 = scmp.ne.s32.totalorder %s43, %s45
    %p52 = scmp.eq.s32.totalorder %s14, 1
    %p53 = por %p51, %p52
    %p54 = scmp.ne.s32.totalorder %s45, %s46
    %p55 = scmp.eq.s32.totalorder %s14, 0
    %p56 = por %p54, %p55
    %p57 = scmp.ne.s32.totalorder %s45, %s46
    %p58 = scmp.eq.s32.totalorder %s15, 1
    %p59 = por %p57, %p58
    %p61 = scmp.ne.s32.totalorder %s46, %s60
    %p62 = scmp.eq.s32.totalorder %s15, 0
    %p63 = por %p61, %p62
    %s65 = sadd.s32 %s64, 1
    %p68 = scmp.eq.s32.totalorder %s9, 1
    %p69 = scmp.ne.s32.totalorder %s64, %s66
    %p70 = scmp.eq.s32.totalorder %s9, 0
    %p71 = por %p69, %p70
    %p72 = scmp.ne.s32.totalorder %s64, %s66
    %p73 = scmp.eq.s32.totalorder %s14, 1
    %p74 = por %p72, %p73
    %p75 = scmp.ne.s32.totalorder %s66, %s67
    %p76 = scmp.eq.s32.totalorder %s14, 0
    %p77 = por %p75, %p76
    %p78 = scmp.ne.s32.totalorder %s66, %s67
    %p79 = scmp.eq.s32.totalorder %s15, 1
    %p80 = por %p78, %p79
    %p82 = scmp.ne.s32.totalorder %s67, %s81
    %p83 = scmp.eq.s32.totalorder %s15, 0
    %p84 = por %p82, %p83
    %s85 = ssub.s32 %s9, %s16
    %p86 = scmp.eq.s32.totalorder %s85, 0
    %s88 = sadd.s32 %s87, 1
    %s89 = scalar_select %p86, %s87, %s88
    %p92 = pneg %p86
    %p93 = scmp.eq.s32.totalorder %s9, 1
    %p94 = por %p92, %p93
    %p95 = scmp.ne.s32.totalorder %s87, %s90
    %p96 = scmp.eq.s32.totalorder %s9, 0
    %p97 = por %p95, %p96
    %p98 = scmp.ne.s32.totalorder %s87, %s90
    %p99 = scmp.eq.s32.totalorder %s14, 1
    %p100 = por %p98, %p99
    %p101 = scmp.ne.s32.totalorder %s90, %s91
    %p102 = scmp.eq.s32.totalorder %s14, 0
    %p103 = por %p101, %p102
    %p104 = scmp.ne.s32.totalorder %s90, %s91
    %p105 = scmp.eq.s32.totalorder %s15, 1
    %p106 = por %p104, %p105
    %p108 = scmp.ne.s32.totalorder %s91, %s107
    %p109 = scmp.eq.s32.totalorder %s15, 0
    %p110 = por %p108, %p109
    %p111 = scmp.le.s32.totalorder 1, %s9
    %p112 = scmp.lt.s32.totalorder %s9, 3
    %p113 = pnand %p111, %p112
    %p114 = pneg %p113
    // Predicated region
    $region9: #{fused_forward.1} parent=5 // pred_check
      _
    $region10: #{fused_forward.1} parent=5 // pred_check_branch
      %116 = sbr.rel (%p113) target = $region12
    $region11: #{fused_forward.1} parent=5 // pred_region
      %s117 = ssub.s32 %s9, 1
      // Predicated region
      $region13: #{fused_forward.1} parent=11 // pred_check
        %p118 = pneg %p56
      $region14: #{fused_forward.1} parent=11 // pred_check_branch
        %120 = sbr.rel (%p118) target = $region16
      $region15: #{fused_forward.1} parent=11 // pred_region
        _
      $region16: #{fused_forward.1} parent=11 // pred_fallthru
        _
      // Predicated region
      $region17: #{fused_forward.1} parent=11 // pred_check
        %p121 = pneg %p77
      $region18: #{fused_forward.1} parent=11 // pred_check_branch
        %123 = sbr.rel (%p121) target = $region20
      $region19: #{fused_forward.1} parent=11 // pred_region
        _
      $region20: #{fused_forward.1} parent=11 // pred_fallthru
        _
    $region12: #{fused_forward.1} parent=5 // pred_fallthru
      _
    %p124 = scmp.lt.s32.totalorder %s9, 2
    // Predicated region
    $region21: #{fused_forward.1} parent=5 // pred_check
      %p125 = pneg %p124
    $region22: #{fused_forward.1} parent=5 // pred_check_branch
      %127 = sbr.rel (%p125) target = $region24
    $region23: #{fused_forward.1} parent=5 // pred_region
      // Predicated region
      $region25: #{fused_forward.1} parent=23 // pred_check
        %p128 = pneg %p29
      $region26: #{fused_forward.1} parent=23 // pred_check_branch
        %130 = sbr.rel (%p128) target = $region28
      $region27: #{fused_forward.1} parent=23 // pred_region
        %p131 = scmp.lt.s32.totalorder %s9, 1
        %s132 = scalar_select %p131, %s9, 1
        %s133 = smul.addr %s132, 22
        %s134 = smul.addr %s133, 8
        %s135 = scalar_lea.vmem %s0, %s134
      $region28: #{fused_forward.1} parent=23 // pred_fallthru
        _
    $region24: #{fused_forward.1} parent=5 // pred_fallthru
      _
    %p136 = scmp.le.s32.totalorder 1, %s9
    %p137 = scmp.lt.s32.totalorder %s9, 3
    %p138 = pnand %p136, %p137
    %p139 = pneg %p138
    // Predicated region
    $region29: #{fused_forward.1} parent=5 // pred_check
      _
    $region30: #{fused_forward.1} parent=5 // pred_check_branch
      %141 = sbr.rel (%p138) target = $region32
    $region31: #{fused_forward.1} parent=5 // pred_region
      %s142 = ssub.s32 %s9, 1
      %p143 = scmp.lt.s32.totalorder %s14, 1
      %s144 = scalar_select %p143, %s14, 1
      %s145 = smul.addr %s144, 22
      %s146 = smul.addr %s145, 8
      %s147 = scalar_lea.vmem %s0, %s146
      %p148 = pneg %p35
      %p149 = pneg %p32
      %p150 = pneg %p56
      %p151 = pneg %p53
      %p152 = pneg %p77
      %p153 = pneg %p74
      %p154 = pneg %p103
      %p155 = pneg %p100
      %p156 = scmp.lt.s32.totalorder %s14, 1
      %s157 = scalar_select %p156, %s14, 1
      %s158 = smul.addr %s157, 2
      %s159 = scalar_lea.vmem %s3, %s158
      %p160 = scmp.lt.s32.totalorder %s14, 1
      %s161 = scalar_select %p160, %s14, 1
      %s162 = smul.addr %s161, 22
      %s163 = smul.addr %s162, 8
      %s164 = scalar_lea.vmem %s0, %s163
      %p165 = scmp.lt.s32.totalorder %s14, 1
      %s166 = scalar_select %p165, %s14, 1
      %s167 = smul.addr %s166, 2
      %s168 = scalar_lea.vmem %s3, %s167
      %v169 = vld [vmem:[%s1] sm:$0xff]
      %v170 = vld [vmem:[%s1 + $0x8] sm:$0xff]
      %v171 = vld [vmem:[%s164] sm:$0xff]
      %v172 = vld [vmem:[%s164 + $0x8] sm:$0xff]
      %v173 = vld [vmem:[%s164 + $0x10] sm:$0xff]
      %v174 = vld [vmem:[%s164 + $0x18] sm:$0xff]
      %v175 = vld [vmem:[%s164 + $0x20] sm:$0xff]
      %v176 = vld [vmem:[%s164 + $0x28] sm:$0xff]
      %v177 = vld [vmem:[%s164 + $0x30] sm:$0xff]
      %v178 = vld [vmem:[%s164 + $0x38] sm:$0xff]
      %v179 = vld [vmem:[%s164 + $0x40] sm:$0xff]
      %v180 = vld [vmem:[%s164 + $0x48] sm:$0xff]
      %v181 = vld [vmem:[%s164 + $0x50] sm:$0xff]
      %v182 = vld [vmem:[%s164 + $0x58] sm:$0xff]
      %v183 = vld [vmem:[%s164 + $0x60] sm:$0xff]
      %v184 = vld [vmem:[%s164 + $0x68] sm:$0xff]
      %v185 = vld [vmem:[%s164 + $0x70] sm:$0xff]
      %v186 = vld [vmem:[%s164 + $0x78] sm:$0xff]
      %v187 = vld [vmem:[%s164 + $0x80] sm:$0xff]
      %v188 = vld [vmem:[%s164 + $0x88] sm:$0xff]
      %v189 = vld [vmem:[%s164 + $0x90] sm:$0xff]
      %v190 = vld [vmem:[%s164 + $0x98] sm:$0xff]
      %v191 = vld [vmem:[%s164 + $0xa0] sm:$0xff]
      %v192 = vld [vmem:[%s164 + $0xa8] sm:$0xff]
      %vm193 = vcmask 719872
      %v195 = vsel %vm193, %v169, 0
      %v198 = vsel %vm193, %v170, 0
      %200 = vmatpush.msra.mxu0 0.0
      %201 = vmatpush.msra.mxu0 0.0
      %202 = vmatpush.msra.mxu0 0.0
      %203 = vmatpush.msra.mxu0 0.0
      %204 = vmatpush.msra.mxu0 0.0
      %205 = vmatpush.msra.mxu0 %v191
      %206 = vmatpush.msra.mxu0 %v189
      %207 = vmatpush.msra.mxu0 %v187
      %208 = vmatpush.msra.mxu0 %v185
      %209 = vmatpush.msra.mxu0 %v183
      %210 = vmatpush.msra.mxu0 %v181
      %211 = vmatpush.msra.mxu0 %v179
      %212 = vmatpush.msra.mxu0 %v177
      %213 = vmatpush.msra.mxu0 %v175
      %214 = vmatpush.msra.mxu0 %v173
      %215 = vmatpush.msra.mxu0 %v171
      %216 = vmatmul.f32.gmra.mxu0 %v195
      %v217 = vpop.f32.mrf.mxu0
      %v218 = vadd.f32 0.0, %v217
      %219 = vmatmul.f32.gmra.mxu0 %v198
      %v220 = vpop.f32.mrf.mxu0
      %v221 = vadd.f32 0.0, %v220
      %222 = vdwg.mxu0
      %223 = vmatpush.msra.mxu0 0.0
      %224 = vmatpush.msra.mxu0 0.0
      %225 = vmatpush.msra.mxu0 0.0
      %226 = vmatpush.msra.mxu0 0.0
      %227 = vmatpush.msra.mxu0 0.0
      %228 = vmatpush.msra.mxu0 %v192
      %229 = vmatpush.msra.mxu0 %v190
      %230 = vmatpush.msra.mxu0 %v188
      %231 = vmatpush.msra.mxu0 %v186
      %232 = vmatpush.msra.mxu0 %v184
      %233 = vmatpush.msra.mxu0 %v182
      %234 = vmatpush.msra.mxu0 %v180
      %235 = vmatpush.msra.mxu0 %v178
      %236 = vmatpush.msra.mxu0 %v176
      %237 = vmatpush.msra.mxu0 %v174
      %238 = vmatpush.msra.mxu0 %v172
      %239 = vmatmul.f32.gmra.mxu0 %v195
      %v240 = vpop.f32.mrf.mxu0
      %v241 = vadd.f32 0.0, %v240
      %242 = vmatmul.f32.gmra.mxu0 %v198
      %v243 = vpop.f32.mrf.mxu0
      %v244 = vadd.f32 0.0, %v243
      %245 = vdwg.mxu0
      %v246 = vld [vmem:[%s2] sm:$0xff]
      %v247 = vld [vmem:[%s2 + $0x8] sm:$0xff]
      %249 = vset.pattern.permute.xlu0 0
      %250 = vperm.xlu0 %249, %v246
      %v251 = vpop.permute.xlu0 %250
      %254 = vset.pattern.permute.xlu0 0
      %255 = vperm.xlu0 %254, %v247
      %v256 = vpop.permute.xlu0 %255
      %v258 = vadd.f32 %v218, %v241
      %259 = vadd.xlane.f32.xlu0 %v258
      %v260 = vpop.xlane.xlu0 %259
      %v261 = vadd.f32 %v221, %v244
      %262 = vadd.xlane.f32.xlu0 %v261
      %v263 = vpop.xlane.xlu0 %262
      %v264 = vmul.f32 %v218, %v218
      %v265 = vmul.f32 %v241, %v241
      %v266 = vmul.f32 %v221, %v221
      %v267 = vmul.f32 %v244, %v244
      %v268 = vadd.f32 %v264, %v265
      %269 = vadd.xlane.f32.xlu0 %v268
      %v270 = vpop.xlane.xlu0 %269
      %v271 = vadd.f32 %v266, %v267
      %272 = vadd.xlane.f32.xlu0 %v271
      %v273 = vpop.xlane.xlu0 %272
      %v274 = vmul.f32 %v260, 0.0046296297
      %v275 = vmul.f32 %v263, 0.0046296297
      %v276 = vmul.f32 %v270, 0.0046296297
      %v277 = vmul.f32 %v273, 0.0046296297
      %v278 = vmul.f32 %v274, %v274
      %v279 = vmul.f32 %v275, %v275
      %v280 = vsub.f32 %v276, %v278
      %v281 = vsub.f32 %v277, %v279
      %v282 = vmax.f32 %v280, 0.0
      %v283 = vmax.f32 %v281, 0.0
      %v284 = vsub.f32 %v218, %v274
      %v285 = vsub.f32 %v241, %v274
      %v286 = vsub.f32 %v221, %v275
      %v287 = vsub.f32 %v244, %v275
      %v288 = vadd.f32 %v282, 1e-05
      %v289 = vadd.f32 %v283, 1e-05
      %v290 = vrsqrt.pop %v288
      %v291 = vmul.f32 %v290, %v288
      %v292 = vmul.f32 %v291, %v290
      %v293 = vmul.f32 0.5, %v292
      %v294 = vsub.f32 1.5, %v293
      %v295 = vmul.f32 %v290, %v294
      %vm296 = vweird.f32 %v288
      %vm297 = vweird.f32 %v290
      %vm298 = vmor %vm296, %vm297
      %v299 = vsel %vm298, %v290, %v295
      %v300 = vrsqrt.pop %v289
      %v301 = vmul.f32 %v300, %v289
      %v302 = vmul.f32 %v301, %v300
      %v303 = vmul.f32 0.5, %v302
      %v304 = vsub.f32 1.5, %v303
      %v305 = vmul.f32 %v300, %v304
      %vm306 = vweird.f32 %v289
      %vm307 = vweird.f32 %v300
      %vm308 = vmor %vm306, %vm307
      %v309 = vsel %vm308, %v300, %v305
      %v310 = vmul.f32 %v284, %v299
      %v311 = vmul.f32 %v285, %v299
      %v312 = vmul.f32 %v286, %v309
      %v313 = vmul.f32 %v287, %v309
      %v314 = vmax.f32 %v310, -1.0
      %v315 = vmax.f32 %v311, -1.0
      %v316 = vmax.f32 %v312, -1.0
      %v317 = vmax.f32 %v313, -1.0
      %v318 = vmin.f32 %v314, 1.0
      %v319 = vmin.f32 %v315, 1.0
      %v320 = vmin.f32 %v316, 1.0
      %v321 = vmin.f32 %v317, 1.0
      %v322 = vmul.f32 %v318, %v251
      %v323 = vmul.f32 %v319, %v251
      %v324 = vmul.f32 %v320, %v256
      %v325 = vmul.f32 %v321, %v256
      %v326 = vmax.f32 %v322, %v324
      %v327 = vrot.slane %v326, 4
      %v328 = vmax.f32 %v326, %v327
      %v329 = vrot.slane %v328, 2
      %v330 = vmax.f32 %v328, %v329
      %v331 = vrot.slane %v330, 1
      %v332 = vmax.f32 %v330, %v331
      %v333 = vmax.f32 %v323, %v325
      %v334 = vrot.slane %v333, 4
      %v335 = vmax.f32 %v333, %v334
      %v336 = vrot.slane %v335, 2
      %v337 = vmax.f32 %v335, %v336
      %v338 = vrot.slane %v337, 1
      %v339 = vmax.f32 %v337, %v338
      %v342 = vrot.slane %v339, 7
      %vm343 = vcmask 1040384
      %v344 = vsel %vm343, %v332, %v342
      %v346 = vlaneseq
      %vm347 = vcmp.ge.s32.totalorder %v346, 0
      %vm348 = vcmp.lt.s32.totalorder %v346, 256
      %vm349 = vmand %vm347, %vm348
      %350 = vst.msk [vmem:[%s168] sm:$0x3] %vm349, %v344
      %p351 = scmp.lt.s32.totalorder %s14, 1
      %s352 = scalar_select %p351, %s14, 1
      %s353 = smul.addr %s352, 2
      %s354 = scalar_lea.vmem %s3, %s353
      // Predicated region
      $region33: #{fused_forward.1} parent=31 // pred_check
        %p355 = pneg %p100
      $region34: #{fused_forward.1} parent=31 // pred_check_branch
        %357 = sbr.rel (%p355) target = $region36
      $region35: #{fused_forward.1} parent=31 // pred_region
        _
      $region36: #{fused_forward.1} parent=31 // pred_fallthru
        _
    $region32: #{fused_forward.1} parent=5 // pred_fallthru
      _
    %p358 = scmp.le.s32.totalorder 2, %s9
    // Predicated region
    $region37: #{fused_forward.1} parent=5 // pred_check
      %p359 = pneg %p358
    $region38: #{fused_forward.1} parent=5 // pred_check_branch
      %361 = sbr.rel (%p359) target = $region40
    $region39: #{fused_forward.1} parent=5 // pred_region
      %s362 = ssub.s32 %s9, 2
      // Predicated region
      $region41: #{fused_forward.1} parent=39 // pred_check
        %p363 = pneg %p106
      $region42: #{fused_forward.1} parent=39 // pred_check_branch
        %365 = sbr.rel (%p363) target = $region44
      $region43: #{fused_forward.1} parent=39 // pred_region
        %p366 = scmp.lt.s32.totalorder %s15, 1
        %s367 = scalar_select %p366, %s15, 1
        %s368 = smul.addr %s367, 2
        %s369 = scalar_lea.vmem %s3, %s368
      $region44: #{fused_forward.1} parent=39 // pred_fallthru
        _
    $region40: #{fused_forward.1} parent=5 // pred_fallthru
      _
  $region6: #{fused_forward.1} parent=0 // loop_footer
    %s13 = sadd.s32 1, %s9
  $region7: #{fused_forward.1} parent=0 // loop_footer_branch
    %8 = sbr.rel target = $region3
  $region8: #{fused_forward.1} parent=0 // loop_exit
    _

</llo_original>
